<compile_context>
chip_gen: v7x
topology: tpu7x:2x2x1
jax: 0.10.0
libtpu: 0.0.40
codegen_flags: <defaults>
</compile_context>

<pallas_src>
import functools

import jax
import jax.numpy as jnp
import numpy as np
from jax import lax
from jax.experimental import pallas as pl
from jax.experimental.pallas import tpu as pltpu

_NEG_INF = -1e30


def _sig(x):
    # sigmoid via EUP exp + approx reciprocal (keeps the divide off the VALU)
    return pl.reciprocal(1.0 + jnp.exp(-x), approx=True)


def _paired_kidney_kernel(num_layers, bias_ref, p_ref, s_ref, out_ref):
    """Packed parameter rows (width = H); GAT layer 0 already folded host-side:
         [0,          (L-1)*H)        : W_l^T for l = 1..L-1 (stacked, pre-transposed)
         [(L-1)*H,     L*H    )       : tw2^T  (time-embedding 2nd Linear, transposed)
         vec_base + 3*(l-1) + {0,1,2} : gat bias_l, att_src_l, att_dst_l   (l >= 1)
         ext + {0..6}                 : x0_row (folded layer-0 output), tw1, tb1,
                                        tb2, ipw, mpw, mgw
       SMEM scalars: [timestep, ipb, mpb, mgb]
    """
    N = bias_ref.shape[0]
    H = p_ref.shape[1]
    out_w = out_ref.shape[1]
    L = num_layers
    vec_base = L * H
    ext = vec_base + 3 * (L - 1)

    att_bias = bias_ref[...]                                      # (N, N): 0 or -1e30

    # [R1] layer 0 folded host-side: x starts as a broadcast of the precomputed row.
    x = jnp.broadcast_to(p_ref[ext:ext + 1, :], (N, H))

    for l in range(1, L):
        h = jnp.dot(x, p_ref[(l - 1) * H: l * H, :],
                    preferred_element_type=jnp.float32)           # (N, H)

        vrow = vec_base + 3 * (l - 1)
        b = p_ref[vrow: vrow + 1, :]                              # (1, H)
        asrc = p_ref[vrow + 1: vrow + 2, :]                       # (1, H)
        adst = p_ref[vrow + 2: vrow + 3, :]                       # (1, H)

        # attention logits  e[i, j] = LeakyReLU(a_dst.h_i + a_src.h_j) + mask bias
        ed = lax.dot_general(h, adst, (((1,), (1,)), ((), ())),
                             preferred_element_type=jnp.float32)  # (N, 1)
        es = lax.dot_general(asrc, h, (((1,), (1,)), ((), ())),
                             preferred_element_type=jnp.float32)  # (1, N)
        z = ed + es                                               # (N, N)
        z = jnp.maximum(z, 0.2 * z) + att_bias                    # LeakyReLU(0.2) + mask

        # masked softmax over sources j (masked entries underflow to exactly 0);
        # exact per-row normalization, all in f32.
        m = jnp.max(z, axis=1, keepdims=True)
        p = jnp.exp(z - m)
        alpha = p * (1.0 / jnp.sum(p, axis=1, keepdims=True))

        out = jnp.dot(alpha, h, preferred_element_type=jnp.float32) + b
        if l < L - 1:
            out = jnp.maximum(out, 0.0)                           # ReLU between GAT layers
        x = out

    # time embedding: Linear(1, H) -> SiLU -> Linear(H, H)
    t = s_ref[0]
    te = t * p_ref[ext + 1: ext + 2, :] + p_ref[ext + 2: ext + 3, :]       # (1, H)
    te = te * _sig(te)                                                     # SiLU
    te = jnp.dot(te, p_ref[(L - 1) * H: L * H, :],
                 preferred_element_type=jnp.float32) + p_ref[ext + 3: ext + 4, :]

    node = x + te                                                          # (N, H)

    # heads
    item_row = _sig(
        lax.dot_general(p_ref[ext + 4: ext + 5, :], node,
                        (((1,), (1,)), ((), ())),
                        preferred_element_type=jnp.float32) + s_ref[1])    # (1, N)
    g = jnp.sum(node, axis=0, keepdims=True) * (1.0 / N)                   # (1, H)
    mp = _sig(jnp.sum(g * p_ref[ext + 5: ext + 6, :], axis=1, keepdims=True)
              + s_ref[2])                                                  # (1, 1)
    mg = _sig(jnp.sum(g * p_ref[ext + 6: ext + 7, :], axis=1, keepdims=True)
              + s_ref[3])                                                  # (1, 1)

    # [R2] one fused, lane-dense, unmasked store:
    #   row = [item(N), match_priority, match_global, 0, ...]   shape (1, out_w)
    r_idx = lax.broadcasted_iota(jnp.int32, (N, out_w), 0)
    c_idx = lax.broadcasted_iota(jnp.int32, (N, out_w), 1)
    scatter = (r_idx == c_idx).astype(jnp.float32)                         # (N, out_w) "eye"
    row = jnp.dot(item_row, scatter, preferred_element_type=jnp.float32)   # (1, out_w)
    lane = lax.broadcasted_iota(jnp.int32, (1, out_w), 1)
    row = jnp.where(lane == N, mp, row)
    row = jnp.where(lane == N + 1, mg, row)
    out_ref[...] = row


def init_params(key, hidden_dim, num_layers=3):
    """Deterministic synthetic parameters, PyTorch-style shapes."""
    H, L = hidden_dim, num_layers
    keys = jax.random.split(key, 14)
    s = 0.2
    return {
        # GATConv per layer: lin.weight (H_out, H_in), att_src / att_dst (H,), bias (H,)
        "gat_w":    jax.random.normal(keys[0], (L, H, H), jnp.float32) * s,
        "gat_b":    jax.random.normal(keys[1], (L, H), jnp.float32) * s,
        "gat_asrc": jax.random.normal(keys[2], (L, H), jnp.float32) * s,
        "gat_adst": jax.random.normal(keys[3], (L, H), jnp.float32) * s,
        # time_embedding: Linear(1, H), Linear(H, H)
        "tw1": jax.random.normal(keys[4], (H, 1), jnp.float32) * s,
        "tb1": jax.random.normal(keys[5], (H,), jnp.float32) * s,
        "tw2": jax.random.normal(keys[6], (H, H), jnp.float32) * s,
        "tb2": jax.random.normal(keys[7], (H,), jnp.float32) * s,
        # heads
        "ipw": jax.random.normal(keys[8], (1, H), jnp.float32) * s,
        "ipb": jax.random.normal(keys[9], (1,), jnp.float32) * s,
        "mpw": jax.random.normal(keys[10], (1, H), jnp.float32) * s,
        "mpb": jax.random.normal(keys[11], (1,), jnp.float32) * s,
        "mgw": jax.random.normal(keys[12], (1, H), jnp.float32) * s,
        "mgb": jax.random.normal(keys[13], (1,), jnp.float32) * s,
    }


def paired_kidney_forward(params, adj_matrix, timestep):
    N = adj_matrix.shape[0]
    L, H, _ = params["gat_w"].shape
    out_w = ((N + 2 + 127) // 128) * 128          # lane-padded fused output width

    # --- glue: fold self-loops + adjacency mask into an additive bias matrix ---
    adj_t = jnp.transpose(adj_matrix).astype(jnp.float32)      # adj_t[i, j] = adj[j, i]
    mask = jnp.logical_or(adj_t != 0.0, jnp.eye(N, dtype=bool))
    att_bias = jnp.where(mask, 0.0, _NEG_INF).astype(jnp.float32)

    # --- [R1] fold GAT layer 0 on the host: x = ones(N,H) => its output row is
    #     relu(colsum(W0^T) + b0), adjacency-independent because self-loops keep
    #     every softmax row non-empty and summing to 1. ---
    x0 = jnp.sum(params["gat_w"][0], axis=1) + params["gat_b"][0]   # colsum(W0^T) + b0
    if L > 1:
        x0 = jnp.maximum(x0, 0.0)                                   # ReLU (not last layer)

    # --- glue: pack remaining (rows, H) parameters into a single VMEM array ---
    w_t = jnp.transpose(params["gat_w"][1:], (0, 2, 1)).reshape((L - 1) * H, H)
    tw2_t = jnp.transpose(params["tw2"])                                # (H, H)
    per_layer_vecs = jnp.stack(
        [params["gat_b"][1:], params["gat_asrc"][1:], params["gat_adst"][1:]],
        axis=1).reshape(3 * (L - 1), H)                                 # b, asrc, adst per layer>=1
    extra = jnp.stack([
        x0,
        jnp.reshape(params["tw1"], (H,)),
        params["tb1"],
        params["tb2"],
        jnp.reshape(params["ipw"], (H,)),
        jnp.reshape(params["mpw"], (H,)),
        jnp.reshape(params["mgw"], (H,)),
    ], axis=0)                                                          # (7, H)
    packed = jnp.concatenate([w_t, tw2_t, per_layer_vecs, extra],
                             axis=0).astype(jnp.float32)                # (L*H + 3L + 4, H)

    # --- true scalars go to SMEM ---
    scalars = jnp.concatenate([
        jnp.reshape(timestep.astype(jnp.float32), (1,)),
        params["ipb"], params["mpb"], params["mgb"],
    ]).astype(jnp.float32)                                              # (4,)

    vmem = pl.BlockSpec(memory_space=pltpu.MemorySpace.VMEM)
    smem = pl.BlockSpec(memory_space=pltpu.MemorySpace.SMEM)
    kernel = functools.partial(_paired_kidney_kernel, L)

    out = pl.pallas_call(
        kernel,
        out_shape=jax.ShapeDtypeStruct((1, out_w), jnp.float32),
        in_specs=[vmem, vmem, smem],
        out_specs=vmem,
    )(att_bias, packed, scalars)

    item = jnp.reshape(out[0, :N], (N, 1))
    mprio = jnp.reshape(out[0, N:N + 1], (1, 1))
    mglob = jnp.reshape(out[0, N + 1:N + 2], (1, 1))
    return item, mprio, mglob


def reference_forward(params, adj_matrix, timestep):
    """Pure-JAX reference mirroring the PyTorch forward (no layer-0 fold)."""
    N = adj_matrix.shape[0]
    L, H, _ = params["gat_w"].shape
    hp = lax.Precision.HIGHEST
    mask = jnp.logical_or(jnp.transpose(adj_matrix) != 0.0, jnp.eye(N, dtype=bool))
    x = jnp.ones((N, H), jnp.float32)
    for l in range(L):
        h = jnp.dot(x, params["gat_w"][l].T, precision=hp)
        ed = jnp.dot(h, params["gat_adst"][l], precision=hp)
        es = jnp.dot(h, params["gat_asrc"][l], precision=hp)
        logits = ed[:, None] + es[None, :]
        logits = jnp.where(logits >= 0.0, logits, 0.2 * logits)
        logits = jnp.where(mask, logits, _NEG_INF)
        alpha = jnp.where(mask, jax.nn.softmax(logits, axis=1), 0.0)
        x = jnp.dot(alpha, h, precision=hp) + params["gat_b"][l]
        if l < L - 1:
            x = jax.nn.relu(x)
    t = jnp.reshape(timestep.astype(jnp.float32), (1, 1))
    te = jnp.dot(t, params["tw1"].T, precision=hp) + params["tb1"]
    te = jax.nn.silu(te)
    te = jnp.dot(te, params["tw2"].T, precision=hp) + params["tb2"]
    node = x + te
    item = jax.nn.sigmoid(jnp.dot(node, params["ipw"].T, precision=hp) + params["ipb"])
    g = jnp.mean(node, axis=0, keepdims=True)
    mp = jax.nn.sigmoid(jnp.dot(g, params["mpw"].T, precision=hp) + params["mpb"])
    mg = jax.nn.sigmoid(jnp.dot(g, params["mgw"].T, precision=hp) + params["mgb"])
    return item, mp, mg


if __name__ == "__main__":
    N, H, L = 16, 32, 3                      # num_nodes, hidden_dim, num_layers
    root = jax.random.PRNGKey(0)
    k_adj, k_param = jax.random.split(root)

    adj = (jax.random.uniform(k_adj, (N, N)) < 0.3).astype(jnp.float32)
    adj = adj * (1.0 - jnp.eye(N, dtype=jnp.float32))   # GATConv strips self loops anyway
    timestep = jnp.array(0.7, dtype=jnp.float32)
    params = init_params(k_param, H, L)

    item, mprio, mglob = paired_kidney_forward(params, adj, timestep)
    jax.block_until_ready((item, mprio, mglob))

    assert item.shape == (N, 1) and mprio.shape == (1, 1) and mglob.shape == (1, 1)

    ri, rp, rg = reference_forward(params, adj, timestep)
    np.testing.assert_allclose(np.asarray(item), np.asarray(ri), atol=2e-3, rtol=2e-3)
    np.testing.assert_allclose(np.asarray(mprio), np.asarray(rp), atol=2e-3, rtol=2e-3)
    np.testing.assert_allclose(np.asarray(mglob), np.asarray(rg), atol=2e-3, rtol=2e-3)

    print("KERNEL_OK")
</pallas_src>

<mosaic_0001>
module attributes {stable_mosaic.version = 11 : i64} {
  func.func @_paired_kidney_kernel(%arg0: memref<16x16xf32, #tpu.memory_space<vmem>>, %arg1: memref<109x32xf32, #tpu.memory_space<vmem>>, %arg2: memref<4xf32, #tpu.memory_space<smem>>, %arg3: memref<1x128xf32, #tpu.memory_space<vmem>>) attributes {dimension_semantics = [], scalar_prefetch = 0 : i64, scratch_operands = 0 : i64, tpu.core_type = #tpu.core_type<tc>} {
    %c0 = arith.constant 0 : index
    %c0_0 = arith.constant 0 : index
    %0 = vector.load %arg0[%c0, %c0_0] : memref<16x16xf32, #tpu.memory_space<vmem>>, vector<16x16xf32>
    %c102 = arith.constant 102 : index
    %c0_1 = arith.constant 0 : index
    %1 = vector.load %arg1[%c102, %c0_1] : memref<109x32xf32, #tpu.memory_space<vmem>>, vector<1x32xf32>
    %2 = vector.shape_cast %1 : vector<1x32xf32> to vector<1x32xf32>
    %3 = vector.broadcast %2 : vector<1x32xf32> to vector<16x32xf32>
    %c0_2 = arith.constant 0 : index
    %c0_3 = arith.constant 0 : index
    %4 = vector.load %arg1[%c0_2, %c0_3] : memref<109x32xf32, #tpu.memory_space<vmem>>, vector<32x32xf32>
    %cst = arith.constant dense<0.000000e+00> : vector<16x32xf32>
    %5 = tpu.matmul %3, %4, %cst {dimension_numbers = #tpu.dot_dimension_numbers<[1], [0], [0], [1], [0, 0, 1, 1], [], []>} : vector<16x32xf32>, vector<32x32xf32>, vector<16x32xf32> -> vector<16x32xf32>
    %c96 = arith.constant 96 : index
    %c0_4 = arith.constant 0 : index
    %6 = vector.load %arg1[%c96, %c0_4] : memref<109x32xf32, #tpu.memory_space<vmem>>, vector<1x32xf32>
    %c97 = arith.constant 97 : index
    %c0_5 = arith.constant 0 : index
    %7 = vector.load %arg1[%c97, %c0_5] : memref<109x32xf32, #tpu.memory_space<vmem>>, vector<1x32xf32>
    %c98 = arith.constant 98 : index
    %c0_6 = arith.constant 0 : index
    %8 = vector.load %arg1[%c98, %c0_6] : memref<109x32xf32, #tpu.memory_space<vmem>>, vector<1x32xf32>
    %cst_7 = arith.constant dense<0.000000e+00> : vector<16x1xf32>
    %9 = tpu.matmul %5, %8, %cst_7 {dimension_numbers = #tpu.dot_dimension_numbers<[1], [1], [0], [0], [0, 0, 1, 0], [], []>} : vector<16x32xf32>, vector<1x32xf32>, vector<16x1xf32> -> vector<16x1xf32>
    %cst_8 = arith.constant dense<0.000000e+00> : vector<1x16xf32>
    %10 = tpu.matmul %7, %5, %cst_8 {dimension_numbers = #tpu.dot_dimension_numbers<[1], [1], [0], [0], [0, 0, 1, 0], [], []>} : vector<1x32xf32>, vector<16x32xf32>, vector<1x16xf32> -> vector<1x16xf32>
    %11 = vector.broadcast %9 : vector<16x1xf32> to vector<16x16xf32>
    %12 = vector.broadcast %10 : vector<1x16xf32> to vector<16x16xf32>
    %13 = arith.addf %11, %12 : vector<16x16xf32>
    %cst_9 = arith.constant 2.000000e-01 : f32
    %14 = vector.broadcast %cst_9 : f32 to vector<16x16xf32>
    %15 = arith.mulf %14, %13 : vector<16x16xf32>
    %16 = arith.maximumf %13, %15 : vector<16x16xf32>
    %17 = arith.addf %16, %0 : vector<16x16xf32>
    %cst_10 = arith.constant dense<0xFF800000> : vector<16xf32>
    %18 = vector.multi_reduction <maximumf>, %17, %cst_10 [1] : vector<16x16xf32> to vector<16xf32>
    %19 = vector.shape_cast %18 : vector<16xf32> to vector<16x1xf32>
    %20 = vector.broadcast %19 : vector<16x1xf32> to vector<16x16xf32>
    %21 = arith.subf %17, %20 : vector<16x16xf32>
    %22 = math.exp %21 : vector<16x16xf32>
    %cst_11 = arith.constant dense<0.000000e+00> : vector<16xf32>
    %23 = vector.multi_reduction <add>, %22, %cst_11 [1] : vector<16x16xf32> to vector<16xf32>
    %24 = vector.shape_cast %23 : vector<16xf32> to vector<16x1xf32>
    %cst_12 = arith.constant 1.000000e+00 : f32
    %25 = vector.broadcast %cst_12 : f32 to vector<16x1xf32>
    %26 = arith.divf %25, %24 : vector<16x1xf32>
    %27 = vector.broadcast %26 : vector<16x1xf32> to vector<16x16xf32>
    %28 = arith.mulf %22, %27 : vector<16x16xf32>
    %cst_13 = arith.constant dense<0.000000e+00> : vector<16x32xf32>
    %29 = tpu.matmul %28, %5, %cst_13 {dimension_numbers = #tpu.dot_dimension_numbers<[1], [0], [0], [1], [0, 0, 1, 1], [], []>} : vector<16x16xf32>, vector<16x32xf32>, vector<16x32xf32> -> vector<16x32xf32>
    %30 = vector.broadcast %6 : vector<1x32xf32> to vector<16x32xf32>
    %31 = arith.addf %29, %30 : vector<16x32xf32>
    %cst_14 = arith.constant 0.000000e+00 : f32
    %32 = vector.broadcast %cst_14 : f32 to vector<16x32xf32>
    %33 = arith.maximumf %31, %32 : vector<16x32xf32>
    %c32 = arith.constant 32 : index
    %c0_15 = arith.constant 0 : index
    %34 = vector.load %arg1[%c32, %c0_15] : memref<109x32xf32, #tpu.memory_space<vmem>>, vector<32x32xf32>
    %cst_16 = arith.constant dense<0.000000e+00> : vector<16x32xf32>
    %35 = tpu.matmul %33, %34, %cst_16 {dimension_numbers = #tpu.dot_dimension_numbers<[1], [0], [0], [1], [0, 0, 1, 1], [], []>} : vector<16x32xf32>, vector<32x32xf32>, vector<16x32xf32> -> vector<16x32xf32>
    %c99 = arith.constant 99 : index
    %c0_17 = arith.constant 0 : index
    %36 = vector.load %arg1[%c99, %c0_17] : memref<109x32xf32, #tpu.memory_space<vmem>>, vector<1x32xf32>
    %c100 = arith.constant 100 : index
    %c0_18 = arith.constant 0 : index
    %37 = vector.load %arg1[%c100, %c0_18] : memref<109x32xf32, #tpu.memory_space<vmem>>, vector<1x32xf32>
    %c101 = arith.constant 101 : index
    %c0_19 = arith.constant 0 : index
    %38 = vector.load %arg1[%c101, %c0_19] : memref<109x32xf32, #tpu.memory_space<vmem>>, vector<1x32xf32>
    %cst_20 = arith.constant dense<0.000000e+00> : vector<16x1xf32>
    %39 = tpu.matmul %35, %38, %cst_20 {dimension_numbers = #tpu.dot_dimension_numbers<[1], [1], [0], [0], [0, 0, 1, 0], [], []>} : vector<16x32xf32>, vector<1x32xf32>, vector<16x1xf32> -> vector<16x1xf32>
    %cst_21 = arith.constant dense<0.000000e+00> : vector<1x16xf32>
    %40 = tpu.matmul %37, %35, %cst_21 {dimension_numbers = #tpu.dot_dimension_numbers<[1], [1], [0], [0], [0, 0, 1, 0], [], []>} : vector<1x32xf32>, vector<16x32xf32>, vector<1x16xf32> -> vector<1x16xf32>
    %41 = vector.broadcast %39 : vector<16x1xf32> to vector<16x16xf32>
    %42 = vector.broadcast %40 : vector<1x16xf32> to vector<16x16xf32>
    %43 = arith.addf %41, %42 : vector<16x16xf32>
    %cst_22 = arith.constant 2.000000e-01 : f32
    %44 = vector.broadcast %cst_22 : f32 to vector<16x16xf32>
    %45 = arith.mulf %44, %43 : vector<16x16xf32>
    %46 = arith.maximumf %43, %45 : vector<16x16xf32>
    %47 = arith.addf %46, %0 : vector<16x16xf32>
    %cst_23 = arith.constant dense<0xFF800000> : vector<16xf32>
    %48 = vector.multi_reduction <maximumf>, %47, %cst_23 [1] : vector<16x16xf32> to vector<16xf32>
    %49 = vector.shape_cast %48 : vector<16xf32> to vector<16x1xf32>
    %50 = vector.broadcast %49 : vector<16x1xf32> to vector<16x16xf32>
    %51 = arith.subf %47, %50 : vector<16x16xf32>
    %52 = math.exp %51 : vector<16x16xf32>
    %cst_24 = arith.constant dense<0.000000e+00> : vector<16xf32>
    %53 = vector.multi_reduction <add>, %52, %cst_24 [1] : vector<16x16xf32> to vector<16xf32>
    %54 = vector.shape_cast %53 : vector<16xf32> to vector<16x1xf32>
    %cst_25 = arith.constant 1.000000e+00 : f32
    %55 = vector.broadcast %cst_25 : f32 to vector<16x1xf32>
    %56 = arith.divf %55, %54 : vector<16x1xf32>
    %57 = vector.broadcast %56 : vector<16x1xf32> to vector<16x16xf32>
    %58 = arith.mulf %52, %57 : vector<16x16xf32>
    %cst_26 = arith.constant dense<0.000000e+00> : vector<16x32xf32>
    %59 = tpu.matmul %58, %35, %cst_26 {dimension_numbers = #tpu.dot_dimension_numbers<[1], [0], [0], [1], [0, 0, 1, 1], [], []>} : vector<16x16xf32>, vector<16x32xf32>, vector<16x32xf32> -> vector<16x32xf32>
    %60 = vector.broadcast %36 : vector<1x32xf32> to vector<16x32xf32>
    %61 = arith.addf %59, %60 : vector<16x32xf32>
    %c0_27 = arith.constant 0 : index
    %62 = memref.load %arg2[%c0_27] : memref<4xf32, #tpu.memory_space<smem>>
    %c103 = arith.constant 103 : index
    %c0_28 = arith.constant 0 : index
    %63 = vector.load %arg1[%c103, %c0_28] : memref<109x32xf32, #tpu.memory_space<vmem>>, vector<1x32xf32>
    %64 = vector.broadcast %62 : f32 to vector<1x32xf32>
    %65 = arith.mulf %64, %63 : vector<1x32xf32>
    %c104 = arith.constant 104 : index
    %c0_29 = arith.constant 0 : index
    %66 = vector.load %arg1[%c104, %c0_29] : memref<109x32xf32, #tpu.memory_space<vmem>>, vector<1x32xf32>
    %67 = arith.addf %65, %66 : vector<1x32xf32>
    %cst_30 = arith.constant 0.000000e+00 : f32
    %68 = vector.broadcast %cst_30 : f32 to vector<1x32xf32>
    %69 = arith.subf %68, %67 : vector<1x32xf32>
    %70 = math.exp %69 : vector<1x32xf32>
    %cst_31 = arith.constant 1.000000e+00 : f32
    %71 = vector.broadcast %cst_31 : f32 to vector<1x32xf32>
    %72 = arith.addf %71, %70 : vector<1x32xf32>
    %73 = tpu.reciprocal %72 {approx = true} : vector<1x32xf32> -> vector<1x32xf32>
    %74 = arith.mulf %67, %73 : vector<1x32xf32>
    %c64 = arith.constant 64 : index
    %c0_32 = arith.constant 0 : index
    %75 = vector.load %arg1[%c64, %c0_32] : memref<109x32xf32, #tpu.memory_space<vmem>>, vector<32x32xf32>
    %cst_33 = arith.constant dense<0.000000e+00> : vector<1x32xf32>
    %76 = tpu.matmul %74, %75, %cst_33 {dimension_numbers = #tpu.dot_dimension_numbers<[1], [0], [0], [1], [0, 0, 1, 1], [], []>} : vector<1x32xf32>, vector<32x32xf32>, vector<1x32xf32> -> vector<1x32xf32>
    %c105 = arith.constant 105 : index
    %c0_34 = arith.constant 0 : index
    %77 = vector.load %arg1[%c105, %c0_34] : memref<109x32xf32, #tpu.memory_space<vmem>>, vector<1x32xf32>
    %78 = arith.addf %76, %77 : vector<1x32xf32>
    %79 = vector.broadcast %78 : vector<1x32xf32> to vector<16x32xf32>
    %80 = arith.addf %61, %79 : vector<16x32xf32>
    %c106 = arith.constant 106 : index
    %c0_35 = arith.constant 0 : index
    %81 = vector.load %arg1[%c106, %c0_35] : memref<109x32xf32, #tpu.memory_space<vmem>>, vector<1x32xf32>
    %cst_36 = arith.constant dense<0.000000e+00> : vector<1x16xf32>
    %82 = tpu.matmul %81, %80, %cst_36 {dimension_numbers = #tpu.dot_dimension_numbers<[1], [1], [0], [0], [0, 0, 1, 0], [], []>} : vector<1x32xf32>, vector<16x32xf32>, vector<1x16xf32> -> vector<1x16xf32>
    %c1 = arith.constant 1 : index
    %83 = memref.load %arg2[%c1] : memref<4xf32, #tpu.memory_space<smem>>
    %84 = vector.broadcast %83 : f32 to vector<1x16xf32>
    %85 = arith.addf %82, %84 : vector<1x16xf32>
    %cst_37 = arith.constant 0.000000e+00 : f32
    %86 = vector.broadcast %cst_37 : f32 to vector<1x16xf32>
    %87 = arith.subf %86, %85 : vector<1x16xf32>
    %88 = math.exp %87 : vector<1x16xf32>
    %cst_38 = arith.constant 1.000000e+00 : f32
    %89 = vector.broadcast %cst_38 : f32 to vector<1x16xf32>
    %90 = arith.addf %89, %88 : vector<1x16xf32>
    %91 = tpu.reciprocal %90 {approx = true} : vector<1x16xf32> -> vector<1x16xf32>
    %cst_39 = arith.constant dense<0.000000e+00> : vector<32xf32>
    %92 = vector.multi_reduction <add>, %80, %cst_39 [0] : vector<16x32xf32> to vector<32xf32>
    %93 = vector.shape_cast %92 : vector<32xf32> to vector<1x32xf32>
    %cst_40 = arith.constant 6.250000e-02 : f32
    %94 = vector.broadcast %cst_40 : f32 to vector<1x32xf32>
    %95 = arith.mulf %93, %94 : vector<1x32xf32>
    %c107 = arith.constant 107 : index
    %c0_41 = arith.constant 0 : index
    %96 = vector.load %arg1[%c107, %c0_41] : memref<109x32xf32, #tpu.memory_space<vmem>>, vector<1x32xf32>
    %97 = arith.mulf %95, %96 : vector<1x32xf32>
    %cst_42 = arith.constant dense<0.000000e+00> : vector<1xf32>
    %98 = vector.multi_reduction <add>, %97, %cst_42 [1] : vector<1x32xf32> to vector<1xf32>
    %99 = vector.shape_cast %98 : vector<1xf32> to vector<1x1xf32>
    %c2 = arith.constant 2 : index
    %100 = memref.load %arg2[%c2] : memref<4xf32, #tpu.memory_space<smem>>
    %101 = vector.broadcast %100 : f32 to vector<1x1xf32>
    %102 = arith.addf %99, %101 : vector<1x1xf32>
    %cst_43 = arith.constant 0.000000e+00 : f32
    %103 = vector.broadcast %cst_43 : f32 to vector<1x1xf32>
    %104 = arith.subf %103, %102 : vector<1x1xf32>
    %105 = math.exp %104 : vector<1x1xf32>
    %cst_44 = arith.constant 1.000000e+00 : f32
    %106 = vector.broadcast %cst_44 : f32 to vector<1x1xf32>
    %107 = arith.addf %106, %105 : vector<1x1xf32>
    %108 = tpu.reciprocal %107 {approx = true} : vector<1x1xf32> -> vector<1x1xf32>
    %c108 = arith.constant 108 : index
    %c0_45 = arith.constant 0 : index
    %109 = vector.load %arg1[%c108, %c0_45] : memref<109x32xf32, #tpu.memory_space<vmem>>, vector<1x32xf32>
    %110 = arith.mulf %95, %109 : vector<1x32xf32>
    %cst_46 = arith.constant dense<0.000000e+00> : vector<1xf32>
    %111 = vector.multi_reduction <add>, %110, %cst_46 [1] : vector<1x32xf32> to vector<1xf32>
    %112 = vector.shape_cast %111 : vector<1xf32> to vector<1x1xf32>
    %c3 = arith.constant 3 : index
    %113 = memref.load %arg2[%c3] : memref<4xf32, #tpu.memory_space<smem>>
    %114 = vector.broadcast %113 : f32 to vector<1x1xf32>
    %115 = arith.addf %112, %114 : vector<1x1xf32>
    %cst_47 = arith.constant 0.000000e+00 : f32
    %116 = vector.broadcast %cst_47 : f32 to vector<1x1xf32>
    %117 = arith.subf %116, %115 : vector<1x1xf32>
    %118 = math.exp %117 : vector<1x1xf32>
    %cst_48 = arith.constant 1.000000e+00 : f32
    %119 = vector.broadcast %cst_48 : f32 to vector<1x1xf32>
    %120 = arith.addf %119, %118 : vector<1x1xf32>
    %121 = tpu.reciprocal %120 {approx = true} : vector<1x1xf32> -> vector<1x1xf32>
    %122 = tpu.iota {dimensions = array<i32: 0>} : vector<16x128xi32>
    %123 = tpu.iota {dimensions = array<i32: 1>} : vector<16x128xi32>
    %124 = arith.cmpi eq, %122, %123 : vector<16x128xi32>
    %125 = arith.extui %124 : vector<16x128xi1> to vector<16x128xi32>
    %126 = arith.sitofp %125 : vector<16x128xi32> to vector<16x128xf32>
    %cst_49 = arith.constant dense<0.000000e+00> : vector<1x128xf32>
    %127 = tpu.matmul %91, %126, %cst_49 {dimension_numbers = #tpu.dot_dimension_numbers<[1], [0], [0], [1], [0, 0, 1, 1], [], []>} : vector<1x16xf32>, vector<16x128xf32>, vector<1x128xf32> -> vector<1x128xf32>
    %128 = tpu.iota {dimensions = array<i32: 1>} : vector<1x128xi32>
    %c16_i32 = arith.constant 16 : i32
    %129 = vector.broadcast %c16_i32 : i32 to vector<1x128xi32>
    %130 = arith.cmpi eq, %128, %129 : vector<1x128xi32>
    %131 = vector.shape_cast %108 : vector<1x1xf32> to vector<1x1xf32>
    %132 = vector.broadcast %131 : vector<1x1xf32> to vector<1x128xf32>
    %133 = arith.select %130, %132, %127 : vector<1x128xi1>, vector<1x128xf32>
    %c17_i32 = arith.constant 17 : i32
    %134 = vector.broadcast %c17_i32 : i32 to vector<1x128xi32>
    %135 = arith.cmpi eq, %128, %134 : vector<1x128xi32>
    %136 = vector.shape_cast %121 : vector<1x1xf32> to vector<1x1xf32>
    %137 = vector.broadcast %136 : vector<1x1xf32> to vector<1x128xf32>
    %138 = arith.select %135, %137, %133 : vector<1x128xi1>, vector<1x128xf32>
    %c0_50 = arith.constant 0 : index
    %c0_51 = arith.constant 0 : index
    %139 = vector.load %arg3[%c0_50, %c0_51] : memref<1x128xf32, #tpu.memory_space<vmem>>, vector<1x128xf32>
    tpu.vector_store %arg3[%c0_50, %c0_51], %138 {strides = array<i32>} : memref<1x128xf32, #tpu.memory_space<vmem>>, vector<1x128xf32>,
    return
  }
}

</mosaic_0001>

<llo_original>
// kernel: tpu_custom_call.1
$region0: #{tpu_custom_call.1}
  #allocation0 [shape = 'u32[]', space=smem, size = 0x4, offset = 0x4, fixed_abs, tag = 'smem constant byte address 0x4 - core index']
  #allocation1 [shape = 'u32[144,128]{1,0:T(1,128)}', space=vmem, size = 0x12000, scoped, tag = 'internal scratch']
  %s0 = inlined_call_operand.vmem [shape: f32[16,16], index: 0, kind: input, shape index: {}]
  %s1 = inlined_call_operand.vmem [shape: f32[109,32], index: 1, kind: input, shape index: {}]
  %s2 = inlined_call_operand.vmem [shape: f32[4], index: 2, kind: input, shape index: {}]
  %s3 = inlined_call_operand.hbm [shape: f32[1,128], index: 3, kind: output, shape index: {}]
  %s4 = sld [smem:[#allocation0]]
  $region26: #{tpu_custom_call.1} parent=0
    _
  %s6 = ssub.s32 1, %s4
  %s7 = scalar_select 0, %s6, %s4
  $region1: #{tpu_custom_call.1} parent=0
    #allocation2 [shape = 'u8[512]{0}', space=smem, size = 0x200, scoped, tag = 'input window, operand 2, single buffered']
    #allocation3 [shape = 's32[1]{0}', space=sflag, size = 0x4, scoped, tag = 'scoped memory for tpu_custom_call.1']
    #allocation4 [shape = 's32[1]{0}', space=sflag, size = 0x4, scoped, tag = 'scoped memory for tpu_custom_call.1']
    #allocation5 [shape = 'u8[512]{0}', space=vmem, size = 0x400, scoped, tag = 'output window, operand 0, single buffered']
    %8 = vsyncpa [#allocation4], 0
    %9 = vsyncpa [#allocation3], 0
    // Predicated region
    $region2: #{tpu_custom_call.1} parent=1 // pred_check
      _
    $region3: #{tpu_custom_call.1} parent=1 // pred_check_branch
      %11 = sbr.rel (0) target = $region5
    $region4: #{tpu_custom_call.1} parent=1 // pred_region
      _
    $region5: #{tpu_custom_call.1} parent=1 // pred_fallthru
      _
    // Predicated region
    $region6: #{tpu_custom_call.1} parent=1 // pred_check
      _
    $region7: #{tpu_custom_call.1} parent=1 // pred_check_branch
      %13 = sbr.rel (0) target = $region9
    $region8: #{tpu_custom_call.1} parent=1 // pred_region
      _
    $region9: #{tpu_custom_call.1} parent=1 // pred_fallthru
      _
    // Predicated region
    $region10: #{tpu_custom_call.1} parent=1 // pred_check
      _
    $region11: #{tpu_custom_call.1} parent=1 // pred_check_branch
      %15 = sbr.rel (0) target = $region13
    $region12: #{tpu_custom_call.1} parent=1 // pred_region
      %s17 = ssub.s32 16, 16
      %18 = vsyncadd [#allocation4], %s17
      %s20 = sshll.u32 %s2, 4
      %s21 = int_to_ptr.vmem [resolvable:$true] %s20
      %23 = dma.vmem_to_smem %s21, 16, [#allocation2], [#allocation4]
    $region13: #{tpu_custom_call.1} parent=1 // pred_fallthru
      _
    // Predicated region
    $region14: #{tpu_custom_call.1} parent=1 // pred_check
      _
    $region15: #{tpu_custom_call.1} parent=1 // pred_check_branch
      %25 = sbr.rel (0) target = $region17
    $region16: #{tpu_custom_call.1} parent=1 // pred_region
      %26 = dma.done [#allocation4], 16
    $region17: #{tpu_custom_call.1} parent=1 // pred_fallthru
      _
    %27 = sfence
    %v28 = vld [vmem:[%s0] sm:$0xff]
    %v29 = vld [vmem:[%s0 + $0x8] sm:$0xff]
    %v30 = vld [vmem:[%s1 + $0x66] sm:$0x1]
    %v31 = vlaneseq
    %v32 = vshrl.u32 %v31, 7
    %v33 = vsub.s32 0, %v32
    %v34 = vrot.slane %v30, %v33
    %v35 = vld [vmem:[%s1] sm:$0xff]
    %v36 = vld [vmem:[%s1 + $0x8] sm:$0xff]
    %v37 = vld [vmem:[%s1 + $0x10] sm:$0xff]
    %v38 = vld [vmem:[%s1 + $0x18] sm:$0xff]
    %vm40 = vcmask 261120
    %v41 = vsel %vm40, %v34, 0
    %43 = vmatprep.subr.mxu0 0.0
    %44 = vmatpush1.msra.mxu0 %v35
    %45 = vmatprep.subr.mxu0 0.0
    %46 = vmatpush1.msra.mxu0 %v36
    %47 = vmatprep.subr.mxu0 0.0
    %48 = vmatpush1.msra.mxu0 %v37
    %49 = vmatprep.subr.mxu0 0.0
    %50 = vmatpush1.msra.mxu0 %v38
    %51 = vmatprep.subr.mxu0 0.0
    %52 = vmatpush1.msra.mxu0 0.0
    %53 = vmatprep.subr.mxu0 0.0
    %54 = vmatpush1.msra.mxu0 0.0
    %55 = vmatprep.subr.mxu0 0.0
    %56 = vmatpush1.msra.mxu0 0.0
    %57 = vmatprep.subr.mxu0 0.0
    %58 = vmatpush1.msra.mxu0 0.0
    %59 = vmatprep.subr.mxu0 0.0
    %60 = vmatpush1.msra.mxu0 0.0
    %61 = vmatprep.subr.mxu0 0.0
    %62 = vmatpush1.msra.mxu0 0.0
    %63 = vmatprep.subr.mxu0 0.0
    %64 = vmatpush1.msra.mxu0 0.0
    %65 = vmatprep.subr.mxu0 0.0
    %66 = vmatpush1.msra.mxu0 0.0
    %67 = vmatprep.subr.mxu0 0.0
    %68 = vmatpush1.msra.mxu0 0.0
    %69 = vmatprep.subr.mxu0 0.0
    %70 = vmatpush1.msra.mxu0 0.0
    %71 = vmatprep.subr.mxu0 0.0
    %72 = vmatpush1.msra.mxu0 0.0
    %73 = vmatprep.subr.mxu0 0.0
    %74 = vmatpush1.msra.mxu0 0.0
    %75 = vmatprep.subr.mxu0 0.0
    %76 = vmatpush1.msra.mxu0 0.0
    %77 = vmatprep.subr.mxu0 0.0
    %78 = vmatpush1.msra.mxu0 0.0
    %79 = vmatprep.subr.mxu0 0.0
    %80 = vmatpush1.msra.mxu0 0.0
    %81 = vmatprep.subr.mxu0 0.0
    %82 = vmatpush1.msra.mxu0 0.0
    %83 = vmatprep.subr.mxu0 0.0
    %84 = vmatpush1.msra.mxu0 0.0
    %85 = vmatprep.subr.mxu0 0.0
    %86 = vmatpush1.msra.mxu0 0.0
    %87 = vmatprep.subr.mxu0 0.0
    %88 = vmatpush1.msra.mxu0 0.0
    %89 = vmatprep.subr.mxu0 0.0
    %90 = vmatpush1.msra.mxu0 0.0
    %91 = vmatprep.subr.mxu0 0.0
    %92 = vmatpush1.msra.mxu0 0.0
    %93 = vmatprep.subr.mxu0 0.0
    %94 = vmatpush1.msra.mxu0 0.0
    %95 = vmatprep.subr.mxu0 0.0
    %96 = vmatpush1.msra.mxu0 0.0
    %97 = vmatprep.subr.mxu0 0.0
    %98 = vmatpush1.msra.mxu0 0.0
    %99 = vmatprep.subr.mxu0 0.0
    %100 = vmatpush1.msra.mxu0 0.0
    %101 = vmatprep.subr.mxu0 0.0
    %102 = vmatpush1.msra.mxu0 0.0
    %103 = vmatprep.subr.mxu0 0.0
    %104 = vmatpush1.msra.mxu0 0.0
    %105 = vmatprep.subr.mxu0 0.0
    %106 = vmatpush1.msra.mxu0 0.0
    %107 = vmatprep.mubr.f32.mxu0 0.0
    %108 = vmatmul.mubr.f32.gmra.mrb[0].mxu0 %v41
    %v109 = vpop.f32.mrb[0].mxu0
    %v110 = vadd.f32 0.0, %v109
    %v111 = vpop.f32.mrb[0].mxu0
    %112 = vmatprep.mubr.f32.mxu0 0.0
    %113 = vmatmul.mubr.f32.gmra.mrb[0].mxu0 %v41
    %v114 = vpop.f32.mrb[0].mxu0
    %v115 = vadd.f32 0.0, %v114
    %v116 = vpop.f32.mrb[0].mxu0
    %117 = vdwg.mxu0
    %v118 = vld [vmem:[%s1 + $0x60] sm:$0x1]
    %v119 = vld [vmem:[%s1 + $0x61] sm:$0x1]
    %v120 = vld [vmem:[%s1 + $0x62] sm:$0x1]
    %v121 = vlaneseq
    %v122 = vshrl.u32 %v121, 7
    %v123 = vsub.s32 0, %v122
    %v124 = vrot.slane %v120, %v123
    %v125 = vmul.f32 %v110, %v124
    %v126 = vmul.f32 %v115, %v124
    %v127 = vsel %vm40, %v125, 0.0
    %128 = vadd.xlane.f32.xlu0 %v127
    %v129 = vpop.xlane.xlu0 %128
    %v130 = vsel %vm40, %v126, 0.0
    %131 = vadd.xlane.f32.xlu0 %v130
    %v132 = vpop.xlane.xlu0 %131
    %v134 = vsel %vm40, %v119, 0
    %v137 = vsel %vm40, %v110, 0
    %v140 = vsel %vm40, %v115, 0
    %142 = vmatprep.subr.mxu0 0.0
    %143 = vmatpush1.xpose.msra.mxu0 %v137
    %144 = vmatprep.subr.mxu0 0.0
    %145 = vmatpush1.xpose.msra.mxu0 %v140
    %146 = vmatprep.subr.mxu0 0.0
    %147 = vmatpush1.xpose.msra.mxu0 0.0
    %148 = vmatprep.subr.mxu0 0.0
    %149 = vmatpush1.xpose.msra.mxu0 0.0
    %150 = vmatprep.subr.mxu0 0.0
    %151 = vmatpush1.xpose.msra.mxu0 0.0
    %152 = vmatprep.subr.mxu0 0.0
    %153 = vmatpush1.xpose.msra.mxu0 0.0
    %154 = vmatprep.subr.mxu0 0.0
    %155 = vmatpush1.xpose.msra.mxu0 0.0
    %156 = vmatprep.subr.mxu0 0.0
    %157 = vmatpush1.xpose.msra.mxu0 0.0
    %158 = vmatprep.subr.mxu0 0.0
    %159 = vmatpush1.xpose.msra.mxu0 0.0
    %160 = vmatprep.subr.mxu0 0.0
    %161 = vmatpush1.xpose.msra.mxu0 0.0
    %162 = vmatprep.subr.mxu0 0.0
    %163 = vmatpush1.xpose.msra.mxu0 0.0
    %164 = vmatprep.subr.mxu0 0.0
    %165 = vmatpush1.xpose.msra.mxu0 0.0
    %166 = vmatprep.subr.mxu0 0.0
    %167 = vmatpush1.xpose.msra.mxu0 0.0
    %168 = vmatprep.subr.mxu0 0.0
    %169 = vmatpush1.xpose.msra.mxu0 0.0
    %170 = vmatprep.subr.mxu0 0.0
    %171 = vmatpush1.xpose.msra.mxu0 0.0
    %172 = vmatprep.subr.mxu0 0.0
    %173 = vmatpush1.xpose.msra.mxu0 0.0
    %174 = vmatprep.subr.mxu0 0.0
    %175 = vmatpush1.xpose.msra.mxu0 0.0
    %176 = vmatprep.subr.mxu0 0.0
    %177 = vmatpush1.xpose.msra.mxu0 0.0
    %178 = vmatprep.subr.mxu0 0.0
    %179 = vmatpush1.xpose.msra.mxu0 0.0
    %180 = vmatprep.subr.mxu0 0.0
    %181 = vmatpush1.xpose.msra.mxu0 0.0
    %182 = vmatprep.subr.mxu0 0.0
    %183 = vmatpush1.xpose.msra.mxu0 0.0
    %184 = vmatprep.subr.mxu0 0.0
    %185 = vmatpush1.xpose.msra.mxu0 0.0
    %186 = vmatprep.subr.mxu0 0.0
    %187 = vmatpush1.xpose.msra.mxu0 0.0
    %188 = vmatprep.subr.mxu0 0.0
    %189 = vmatpush1.xpose.msra.mxu0 0.0
    %190 = vmatprep.subr.mxu0 0.0
    %191 = vmatpush1.xpose.msra.mxu0 0.0
    %192 = vmatprep.subr.mxu0 0.0
    %193 = vmatpush1.xpose.msra.mxu0 0.0
    %194 = vmatprep.subr.mxu0 0.0
    %195 = vmatpush1.xpose.msra.mxu0 0.0
    %196 = vmatprep.subr.mxu0 0.0
    %197 = vmatpush1.xpose.msra.mxu0 0.0
    %198 = vmatprep.subr.mxu0 0.0
    %199 = vmatpush1.xpose.msra.mxu0 0.0
    %200 = vmatprep.subr.mxu0 0.0
    %201 = vmatpush1.xpose.msra.mxu0 0.0
    %202 = vmatprep.subr.mxu0 0.0
    %203 = vmatpush1.xpose.msra.mxu0 0.0
    %204 = vmatprep.subr.mxu0 0.0
    %205 = vmatpush1.xpose.msra.mxu0 0.0
    %206 = vmatprep.mubr.f32.mxu0 0.0
    %207 = vmatmul.mubr.f32.gmra.mrb[0].mxu0 %v134
    %v208 = vpop.f32.mrb[0].mxu0
    %v209 = vadd.f32 0.0, %v208
    %v210 = vpop.f32.mrb[0].mxu0
    %211 = vdwg.mxu0
    %v212 = vlaneseq
    %v213 = vshrl.u32 %v212, 7
    %v214 = vsub.s32 0, %v213
    %v215 = vrot.slane %v209, %v214
    %v216 = vadd.f32 %v129, %v215
    %v217 = vadd.f32 %v132, %v215
    %v218 = vmul.f32 %v216, 0.2
    %v219 = vmul.f32 %v217, 0.2
    %v220 = vmax.f32 %v216, %v218
    %v221 = vmax.f32 %v217, %v219
    %v222 = vadd.f32 %v220, %v28
    %v223 = vadd.f32 %v221, %v29
    %vm224 = vcmask 130048
    %v225 = vsel %vm224, %v222, -inf
    %226 = vmax.xlane.f32.xlu0 %v225
    %v227 = vpop.xlane.xlu0 %226
    %v228 = vsel %vm224, %v223, -inf
    %229 = vmax.xlane.f32.xlu0 %v228
    %v230 = vpop.xlane.xlu0 %229
    %v231 = vsub.f32 %v222, %v227
    %v232 = vsub.f32 %v223, %v230
    %v233 = vmul.f32 %v231, 1.442695
    %v234 = vpow.pop %v233
    %v235 = vmul.f32 %v232, 1.442695
    %v236 = vpow.pop %v235
    %v237 = vsel %vm224, %v234, 0.0
    %238 = vadd.xlane.f32.xlu0 %v237
    %v239 = vpop.xlane.xlu0 %238
    %v240 = vsel %vm224, %v236, 0.0
    %241 = vadd.xlane.f32.xlu0 %v240
    %v242 = vpop.xlane.xlu0 %241
    %v243 = vrcp.pop %v239
    %v244 = vmul.f32 1.0, %v243
    %v245 = vrcp.pop %v242
    %v246 = vmul.f32 1.0, %v245
    %v247 = vmul.f32 %v234, %v244
    %v248 = vmul.f32 %v236, %v246
    %v249 = vlaneseq
    %v250 = vshrl.u32 %v249, 7
    %v251 = vsub.s32 0, %v250
    %v252 = vrot.slane %v118, %v251
    %v254 = vsel %vm224, %v247, 0
    %v257 = vsel %vm224, %v248, 0
    %259 = vmatprep.subr.mxu0 0.0
    %260 = vmatpush1.msra.mxu0 %v110
    %261 = vmatprep.subr.mxu0 0.0
    %262 = vmatpush1.msra.mxu0 %v115
    %263 = vmatprep.subr.mxu0 0.0
    %264 = vmatpush1.msra.mxu0 0.0
    %265 = vmatprep.subr.mxu0 0.0
    %266 = vmatpush1.msra.mxu0 0.0
    %267 = vmatprep.subr.mxu0 0.0
    %268 = vmatpush1.msra.mxu0 0.0
    %269 = vmatprep.subr.mxu0 0.0
    %270 = vmatpush1.msra.mxu0 0.0
    %271 = vmatprep.subr.mxu0 0.0
    %272 = vmatpush1.msra.mxu0 0.0
    %273 = vmatprep.subr.mxu0 0.0
    %274 = vmatpush1.msra.mxu0 0.0
    %275 = vmatprep.subr.mxu0 0.0
    %276 = vmatpush1.msra.mxu0 0.0
    %277 = vmatprep.subr.mxu0 0.0
    %278 = vmatpush1.msra.mxu0 0.0
    %279 = vmatprep.subr.mxu0 0.0
    %280 = vmatpush1.msra.mxu0 0.0
    %281 = vmatprep.subr.mxu0 0.0
    %282 = vmatpush1.msra.mxu0 0.0
    %283 = vmatprep.subr.mxu0 0.0
    %284 = vmatpush1.msra.mxu0 0.0
    %285 = vmatprep.subr.mxu0 0.0
    %286 = vmatpush1.msra.mxu0 0.0
    %287 = vmatprep.subr.mxu0 0.0
    %288 = vmatpush1.msra.mxu0 0.0
    %289 = vmatprep.subr.mxu0 0.0
    %290 = vmatpush1.msra.mxu0 0.0
    %291 = vmatprep.subr.mxu0 0.0
    %292 = vmatpush1.msra.mxu0 0.0
    %293 = vmatprep.subr.mxu0 0.0
    %294 = vmatpush1.msra.mxu0 0.0
    %295 = vmatprep.subr.mxu0 0.0
    %296 = vmatpush1.msra.mxu0 0.0
    %297 = vmatprep.subr.mxu0 0.0
    %298 = vmatpush1.msra.mxu0 0.0
    %299 = vmatprep.subr.mxu0 0.0
    %300 = vmatpush1.msra.mxu0 0.0
    %301 = vmatprep.subr.mxu0 0.0
    %302 = vmatpush1.msra.mxu0 0.0
    %303 = vmatprep.subr.mxu0 0.0
    %304 = vmatpush1.msra.mxu0 0.0
    %305 = vmatprep.subr.mxu0 0.0
    %306 = vmatpush1.msra.mxu0 0.0
    %307 = vmatprep.subr.mxu0 0.0
    %308 = vmatpush1.msra.mxu0 0.0
    %309 = vmatprep.subr.mxu0 0.0
    %310 = vmatpush1.msra.mxu0 0.0
    %311 = vmatprep.subr.mxu0 0.0
    %312 = vmatpush1.msra.mxu0 0.0
    %313 = vmatprep.subr.mxu0 0.0
    %314 = vmatpush1.msra.mxu0 0.0
    %315 = vmatprep.subr.mxu0 0.0
    %316 = vmatpush1.msra.mxu0 0.0
    %317 = vmatprep.subr.mxu0 0.0
    %318 = vmatpush1.msra.mxu0 0.0
    %319 = vmatprep.subr.mxu0 0.0
    %320 = vmatpush1.msra.mxu0 0.0
    %321 = vmatprep.subr.mxu0 0.0
    %322 = vmatpush1.msra.mxu0 0.0
    %323 = vmatprep.mubr.f32.mxu0 0.0
    %324 = vmatmul.mubr.f32.gmra.mrb[0].mxu0 %v254
    %v325 = vpop.f32.mrb[0].mxu0
    %v326 = vadd.f32 %v252, %v325
    %v327 = vpop.f32.mrb[0].mxu0
    %328 = vmatprep.mubr.f32.mxu0 0.0
    %329 = vmatmul.mubr.f32.gmra.mrb[0].mxu0 %v257
    %v330 = vpop.f32.mrb[0].mxu0
    %v331 = vadd.f32 %v252, %v330
    %v332 = vpop.f32.mrb[0].mxu0
    %333 = vdwg.mxu0
    %v334 = vmax.f32 %v326, 0.0
    %v335 = vmax.f32 %v331, 0.0
    %v336 = vld [vmem:[%s1 + $0x20] sm:$0xff]
    %v337 = vld [vmem:[%s1 + $0x28] sm:$0xff]
    %v338 = vld [vmem:[%s1 + $0x30] sm:$0xff]
    %v339 = vld [vmem:[%s1 + $0x38] sm:$0xff]
    %v341 = vsel %vm40, %v334, 0
    %v344 = vsel %vm40, %v335, 0
    %346 = vmatprep.subr.mxu0 0.0
    %347 = vmatpush1.msra.mxu0 %v336
    %348 = vmatprep.subr.mxu0 0.0
    %349 = vmatpush1.msra.mxu0 %v337
    %350 = vmatprep.subr.mxu0 0.0
    %351 = vmatpush1.msra.mxu0 %v338
    %352 = vmatprep.subr.mxu0 0.0
    %353 = vmatpush1.msra.mxu0 %v339
    %354 = vmatprep.subr.mxu0 0.0
    %355 = vmatpush1.msra.mxu0 0.0
    %356 = vmatprep.subr.mxu0 0.0
    %357 = vmatpush1.msra.mxu0 0.0
    %358 = vmatprep.subr.mxu0 0.0
    %359 = vmatpush1.msra.mxu0 0.0
    %360 = vmatprep.subr.mxu0 0.0
    %361 = vmatpush1.msra.mxu0 0.0
    %362 = vmatprep.subr.mxu0 0.0
    %363 = vmatpush1.msra.mxu0 0.0
    %364 = vmatprep.subr.mxu0 0.0
    %365 = vmatpush1.msra.mxu0 0.0
    %366 = vmatprep.subr.mxu0 0.0
    %367 = vmatpush1.msra.mxu0 0.0
    %368 = vmatprep.subr.mxu0 0.0
    %369 = vmatpush1.msra.mxu0 0.0
    %370 = vmatprep.subr.mxu0 0.0
    %371 = vmatpush1.msra.mxu0 0.0
    %372 = vmatprep.subr.mxu0 0.0
    %373 = vmatpush1.msra.mxu0 0.0
    %374 = vmatprep.subr.mxu0 0.0
    %375 = vmatpush1.msra.mxu0 0.0
    %376 = vmatprep.subr.mxu0 0.0
    %377 = vmatpush1.msra.mxu0 0.0
    %378 = vmatprep.subr.mxu0 0.0
    %379 = vmatpush1.msra.mxu0 0.0
    %380 = vmatprep.subr.mxu0 0.0
    %381 = vmatpush1.msra.mxu0 0.0
    %382 = vmatprep.subr.mxu0 0.0
    %383 = vmatpush1.msra.mxu0 0.0
    %384 = vmatprep.subr.mxu0 0.0
    %385 = vmatpush1.msra.mxu0 0.0
    %386 = vmatprep.subr.mxu0 0.0
    %387 = vmatpush1.msra.mxu0 0.0
    %388 = vmatprep.subr.mxu0 0.0
    %389 = vmatpush1.msra.mxu0 0.0
    %390 = vmatprep.subr.mxu0 0.0
    %391 = vmatpush1.msra.mxu0 0.0
    %392 = vmatprep.subr.mxu0 0.0
    %393 = vmatpush1.msra.mxu0 0.0
    %394 = vmatprep.subr.mxu0 0.0
    %395 = vmatpush1.msra.mxu0 0.0
    %396 = vmatprep.subr.mxu0 0.0
    %397 = vmatpush1.msra.mxu0 0.0
    %398 = vmatprep.subr.mxu0 0.0
    %399 = vmatpush1.msra.mxu0 0.0
    %400 = vmatprep.subr.mxu0 0.0
    %401 = vmatpush1.msra.mxu0 0.0
    %402 = vmatprep.subr.mxu0 0.0
    %403 = vmatpush1.msra.mxu0 0.0
    %404 = vmatprep.subr.mxu0 0.0
    %405 = vmatpush1.msra.mxu0 0.0
    %406 = vmatprep.subr.mxu0 0.0
    %407 = vmatpush1.msra.mxu0 0.0
    %408 = vmatprep.subr.mxu0 0.0
    %409 = vmatpush1.msra.mxu0 0.0
    %410 = vmatprep.mubr.f32.mxu0 0.0
    %411 = vmatmul.mubr.f32.gmra.mrb[0].mxu0 %v341
    %v412 = vpop.f32.mrb[0].mxu0
    %v413 = vadd.f32 0.0, %v412
    %v414 = vpop.f32.mrb[0].mxu0
    %415 = vmatprep.mubr.f32.mxu0 0.0
    %416 = vmatmul.mubr.f32.gmra.mrb[0].mxu0 %v344
    %v417 = vpop.f32.mrb[0].mxu0
    %v418 = vadd.f32 0.0, %v417
    %v419 = vpop.f32.mrb[0].mxu0
    %420 = vdwg.mxu0
    %v421 = vld [vmem:[%s1 + $0x63] sm:$0x1]
    %v422 = vld [vmem:[%s1 + $0x64] sm:$0x1]
    %v423 = vld [vmem:[%s1 + $0x65] sm:$0x1]
    %v424 = vlaneseq
    %v425 = vshrl.u32 %v424, 7
    %v426 = vsub.s32 0, %v425
    %v427 = vrot.slane %v423, %v426
    %v428 = vmul.f32 %v413, %v427
    %v429 = vmul.f32 %v418, %v427
    %v430 = vsel %vm40, %v428, 0.0
    %431 = vadd.xlane.f32.xlu0 %v430
    %v432 = vpop.xlane.xlu0 %431
    %v433 = vsel %vm40, %v429, 0.0
    %434 = vadd.xlane.f32.xlu0 %v433
    %v435 = vpop.xlane.xlu0 %434
    %v437 = vsel %vm40, %v422, 0
    %v440 = vsel %vm40, %v413, 0
    %v443 = vsel %vm40, %v418, 0
    %445 = vmatprep.subr.mxu0 0.0
    %446 = vmatpush1.xpose.msra.mxu0 %v440
    %447 = vmatprep.subr.mxu0 0.0
    %448 = vmatpush1.xpose.msra.mxu0 %v443
    %449 = vmatprep.subr.mxu0 0.0
    %450 = vmatpush1.xpose.msra.mxu0 0.0
    %451 = vmatprep.subr.mxu0 0.0
    %452 = vmatpush1.xpose.msra.mxu0 0.0
    %453 = vmatprep.subr.mxu0 0.0
    %454 = vmatpush1.xpose.msra.mxu0 0.0
    %455 = vmatprep.subr.mxu0 0.0
    %456 = vmatpush1.xpose.msra.mxu0 0.0
    %457 = vmatprep.subr.mxu0 0.0
    %458 = vmatpush1.xpose.msra.mxu0 0.0
    %459 = vmatprep.subr.mxu0 0.0
    %460 = vmatpush1.xpose.msra.mxu0 0.0
    %461 = vmatprep.subr.mxu0 0.0
    %462 = vmatpush1.xpose.msra.mxu0 0.0
    %463 = vmatprep.subr.mxu0 0.0
    %464 = vmatpush1.xpose.msra.mxu0 0.0
    %465 = vmatprep.subr.mxu0 0.0
    %466 = vmatpush1.xpose.msra.mxu0 0.0
    %467 = vmatprep.subr.mxu0 0.0
    %468 = vmatpush1.xpose.msra.mxu0 0.0
    %469 = vmatprep.subr.mxu0 0.0
    %470 = vmatpush1.xpose.msra.mxu0 0.0
    %471 = vmatprep.subr.mxu0 0.0
    %472 = vmatpush1.xpose.msra.mxu0 0.0
    %473 = vmatprep.subr.mxu0 0.0
    %474 = vmatpush1.xpose.msra.mxu0 0.0
    %475 = vmatprep.subr.mxu0 0.0
    %476 = vmatpush1.xpose.msra.mxu0 0.0
    %477 = vmatprep.subr.mxu0 0.0
    %478 = vmatpush1.xpose.msra.mxu0 0.0
    %479 = vmatprep.subr.mxu0 0.0
    %480 = vmatpush1.xpose.msra.mxu0 0.0
    %481 = vmatprep.subr.mxu0 0.0
    %482 = vmatpush1.xpose.msra.mxu0 0.0
    %483 = vmatprep.subr.mxu0 0.0
    %484 = vmatpush1.xpose.msra.mxu0 0.0
    %485 = vmatprep.subr.mxu0 0.0
    %486 = vmatpush1.xpose.msra.mxu0 0.0
    %487 = vmatprep.subr.mxu0 0.0
    %488 = vmatpush1.xpose.msra.mxu0 0.0
    %489 = vmatprep.subr.mxu0 0.0
    %490 = vmatpush1.xpose.msra.mxu0 0.0
    %491 = vmatprep.subr.mxu0 0.0
    %492 = vmatpush1.xpose.msra.mxu0 0.0
    %493 = vmatprep.subr.mxu0 0.0
    %494 = vmatpush1.xpose.msra.mxu0 0.0
    %495 = vmatprep.subr.mxu0 0.0
    %496 = vmatpush1.xpose.msra.mxu0 0.0
    %497 = vmatprep.subr.mxu0 0.0
    %498 = vmatpush1.xpose.msra.mxu0 0.0
    %499 = vmatprep.subr.mxu0 0.0
    %500 = vmatpush1.xpose.msra.mxu0 0.0
    %501 = vmatprep.subr.mxu0 0.0
    %502 = vmatpush1.xpose.msra.mxu0 0.0
    %503 = vmatprep.subr.mxu0 0.0
    %504 = vmatpush1.xpose.msra.mxu0 0.0
    %505 = vmatprep.subr.mxu0 0.0
    %506 = vmatpush1.xpose.msra.mxu0 0.0
    %507 = vmatprep.subr.mxu0 0.0
    %508 = vmatpush1.xpose.msra.mxu0 0.0
    %509 = vmatprep.mubr.f32.mxu0 0.0
    %510 = vmatmul.mubr.f32.gmra.mrb[0].mxu0 %v437
    %v511 = vpop.f32.mrb[0].mxu0
    %v512 = vadd.f32 0.0, %v511
    %v513 = vpop.f32.mrb[0].mxu0
    %514 = vdwg.mxu0
    %v515 = vlaneseq
    %v516 = vshrl.u32 %v515, 7
    %v517 = vsub.s32 0, %v516
    %v518 = vrot.slane %v512, %v517
    %v519 = vadd.f32 %v432, %v518
    %v520 = vadd.f32 %v435, %v518
    %v521 = vmul.f32 %v519, 0.2
    %v522 = vmul.f32 %v520, 0.2
    %v523 = vmax.f32 %v519, %v521
    %v524 = vmax.f32 %v520, %v522
    %v525 = vadd.f32 %v523, %v28
    %v526 = vadd.f32 %v524, %v29
    %v527 = vsel %vm224, %v525, -inf
    %528 = vmax.xlane.f32.xlu0 %v527
    %v529 = vpop.xlane.xlu0 %528
    %v530 = vsel %vm224, %v526, -inf
    %531 = vmax.xlane.f32.xlu0 %v530
    %v532 = vpop.xlane.xlu0 %531
    %v533 = vsub.f32 %v525, %v529
    %v534 = vsub.f32 %v526, %v532
    %v535 = vmul.f32 %v533, 1.442695
    %v536 = vpow.pop %v535
    %v537 = vmul.f32 %v534, 1.442695
    %v538 = vpow.pop %v537
    %v539 = vsel %vm224, %v536, 0.0
    %540 = vadd.xlane.f32.xlu0 %v539
    %v541 = vpop.xlane.xlu0 %540
    %v542 = vsel %vm224, %v538, 0.0
    %543 = vadd.xlane.f32.xlu0 %v542
    %v544 = vpop.xlane.xlu0 %543
    %v545 = vrcp.pop %v541
    %v546 = vmul.f32 1.0, %v545
    %v547 = vrcp.pop %v544
    %v548 = vmul.f32 1.0, %v547
    %v549 = vmul.f32 %v536, %v546
    %v550 = vmul.f32 %v538, %v548
    %v551 = vlaneseq
    %v552 = vshrl.u32 %v551, 7
    %v553 = vsub.s32 0, %v552
    %v554 = vrot.slane %v421, %v553
    %v556 = vsel %vm224, %v549, 0
    %v559 = vsel %vm224, %v550, 0
    %561 = vmatprep.subr.mxu0 0.0
    %562 = vmatpush1.msra.mxu0 %v413
    %563 = vmatprep.subr.mxu0 0.0
    %564 = vmatpush1.msra.mxu0 %v418
    %565 = vmatprep.subr.mxu0 0.0
    %566 = vmatpush1.msra.mxu0 0.0
    %567 = vmatprep.subr.mxu0 0.0
    %568 = vmatpush1.msra.mxu0 0.0
    %569 = vmatprep.subr.mxu0 0.0
    %570 = vmatpush1.msra.mxu0 0.0
    %571 = vmatprep.subr.mxu0 0.0
    %572 = vmatpush1.msra.mxu0 0.0
    %573 = vmatprep.subr.mxu0 0.0
    %574 = vmatpush1.msra.mxu0 0.0
    %575 = vmatprep.subr.mxu0 0.0
    %576 = vmatpush1.msra.mxu0 0.0
    %577 = vmatprep.subr.mxu0 0.0
    %578 = vmatpush1.msra.mxu0 0.0
    %579 = vmatprep.subr.mxu0 0.0
    %580 = vmatpush1.msra.mxu0 0.0
    %581 = vmatprep.subr.mxu0 0.0
    %582 = vmatpush1.msra.mxu0 0.0
    %583 = vmatprep.subr.mxu0 0.0
    %584 = vmatpush1.msra.mxu0 0.0
    %585 = vmatprep.subr.mxu0 0.0
    %586 = vmatpush1.msra.mxu0 0.0
    %587 = vmatprep.subr.mxu0 0.0
    %588 = vmatpush1.msra.mxu0 0.0
    %589 = vmatprep.subr.mxu0 0.0
    %590 = vmatpush1.msra.mxu0 0.0
    %591 = vmatprep.subr.mxu0 0.0
    %592 = vmatpush1.msra.mxu0 0.0
    %593 = vmatprep.subr.mxu0 0.0
    %594 = vmatpush1.msra.mxu0 0.0
    %595 = vmatprep.subr.mxu0 0.0
    %596 = vmatpush1.msra.mxu0 0.0
    %597 = vmatprep.subr.mxu0 0.0
    %598 = vmatpush1.msra.mxu0 0.0
    %599 = vmatprep.subr.mxu0 0.0
    %600 = vmatpush1.msra.mxu0 0.0
    %601 = vmatprep.subr.mxu0 0.0
    %602 = vmatpush1.msra.mxu0 0.0
    %603 = vmatprep.subr.mxu0 0.0
    %604 = vmatpush1.msra.mxu0 0.0
    %605 = vmatprep.subr.mxu0 0.0
    %606 = vmatpush1.msra.mxu0 0.0
    %607 = vmatprep.subr.mxu0 0.0
    %608 = vmatpush1.msra.mxu0 0.0
    %609 = vmatprep.subr.mxu0 0.0
    %610 = vmatpush1.msra.mxu0 0.0
    %611 = vmatprep.subr.mxu0 0.0
    %612 = vmatpush1.msra.mxu0 0.0
    %613 = vmatprep.subr.mxu0 0.0
    %614 = vmatpush1.msra.mxu0 0.0
    %615 = vmatprep.subr.mxu0 0.0
    %616 = vmatpush1.msra.mxu0 0.0
    %617 = vmatprep.subr.mxu0 0.0
    %618 = vmatpush1.msra.mxu0 0.0
    %619 = vmatprep.subr.mxu0 0.0
    %620 = vmatpush1.msra.mxu0 0.0
    %621 = vmatprep.subr.mxu0 0.0
    %622 = vmatpush1.msra.mxu0 0.0
    %623 = vmatprep.subr.mxu0 0.0
    %624 = vmatpush1.msra.mxu0 0.0
    %625 = vmatprep.mubr.f32.mxu0 0.0
    %626 = vmatmul.mubr.f32.gmra.mrb[0].mxu0 %v556
    %v627 = vpop.f32.mrb[0].mxu0
    %v628 = vadd.f32 %v554, %v627
    %v629 = vpop.f32.mrb[0].mxu0
    %630 = vmatprep.mubr.f32.mxu0 0.0
    %631 = vmatmul.mubr.f32.gmra.mrb[0].mxu0 %v559
    %v632 = vpop.f32.mrb[0].mxu0
    %v633 = vadd.f32 %v554, %v632
    %v634 = vpop.f32.mrb[0].mxu0
    %635 = vdwg.mxu0
    %s636 = sld [smem:[#allocation2]]
    %v637 = vld [vmem:[%s1 + $0x67] sm:$0x1]
    %v638 = vstv %s636
    %v639 = vmul.f32 %v638, %v637
    %v640 = vld [vmem:[%s1 + $0x68] sm:$0x1]
    %v641 = vadd.f32 %v639, %v640
    %v642 = vsub.f32 0.0, %v641
    %v643 = vmul.f32 %v642, 1.442695
    %v644 = vpow.pop %v643
    %v645 = vadd.f32 %v644, 1.0
    %v646 = vrcp.pop %v645
    %v647 = vmul.f32 %v641, %v646
    %v648 = vld [vmem:[%s1 + $0x40] sm:$0xff]
    %v649 = vld [vmem:[%s1 + $0x48] sm:$0xff]
    %v650 = vld [vmem:[%s1 + $0x50] sm:$0xff]
    %v651 = vld [vmem:[%s1 + $0x58] sm:$0xff]
    %v652 = vld [vmem:[%s1 + $0x69] sm:$0x1]
    %v654 = vsel %vm40, %v647, 0
    %656 = vmatprep.subr.mxu0 0.0
    %657 = vmatpush1.msra.mxu0 %v648
    %658 = vmatprep.subr.mxu0 0.0
    %659 = vmatpush1.msra.mxu0 %v649
    %660 = vmatprep.subr.mxu0 0.0
    %661 = vmatpush1.msra.mxu0 %v650
    %662 = vmatprep.subr.mxu0 0.0
    %663 = vmatpush1.msra.mxu0 %v651
    %664 = vmatprep.subr.mxu0 0.0
    %665 = vmatpush1.msra.mxu0 0.0
    %666 = vmatprep.subr.mxu0 0.0
    %667 = vmatpush1.msra.mxu0 0.0
    %668 = vmatprep.subr.mxu0 0.0
    %669 = vmatpush1.msra.mxu0 0.0
    %670 = vmatprep.subr.mxu0 0.0
    %671 = vmatpush1.msra.mxu0 0.0
    %672 = vmatprep.subr.mxu0 0.0
    %673 = vmatpush1.msra.mxu0 0.0
    %674 = vmatprep.subr.mxu0 0.0
    %675 = vmatpush1.msra.mxu0 0.0
    %676 = vmatprep.subr.mxu0 0.0
    %677 = vmatpush1.msra.mxu0 0.0
    %678 = vmatprep.subr.mxu0 0.0
    %679 = vmatpush1.msra.mxu0 0.0
    %680 = vmatprep.subr.mxu0 0.0
    %681 = vmatpush1.msra.mxu0 0.0
    %682 = vmatprep.subr.mxu0 0.0
    %683 = vmatpush1.msra.mxu0 0.0
    %684 = vmatprep.subr.mxu0 0.0
    %685 = vmatpush1.msra.mxu0 0.0
    %686 = vmatprep.subr.mxu0 0.0
    %687 = vmatpush1.msra.mxu0 0.0
    %688 = vmatprep.subr.mxu0 0.0
    %689 = vmatpush1.msra.mxu0 0.0
    %690 = vmatprep.subr.mxu0 0.0
    %691 = vmatpush1.msra.mxu0 0.0
    %692 = vmatprep.subr.mxu0 0.0
    %693 = vmatpush1.msra.mxu0 0.0
    %694 = vmatprep.subr.mxu0 0.0
    %695 = vmatpush1.msra.mxu0 0.0
    %696 = vmatprep.subr.mxu0 0.0
    %697 = vmatpush1.msra.mxu0 0.0
    %698 = vmatprep.subr.mxu0 0.0
    %699 = vmatpush1.msra.mxu0 0.0
    %700 = vmatprep.subr.mxu0 0.0
    %701 = vmatpush1.msra.mxu0 0.0
    %702 = vmatprep.subr.mxu0 0.0
    %703 = vmatpush1.msra.mxu0 0.0
    %704 = vmatprep.subr.mxu0 0.0
    %705 = vmatpush1.msra.mxu0 0.0
    %706 = vmatprep.subr.mxu0 0.0
    %707 = vmatpush1.msra.mxu0 0.0
    %708 = vmatprep.subr.mxu0 0.0
    %709 = vmatpush1.msra.mxu0 0.0
    %710 = vmatprep.subr.mxu0 0.0
    %711 = vmatpush1.msra.mxu0 0.0
    %712 = vmatprep.subr.mxu0 0.0
    %713 = vmatpush1.msra.mxu0 0.0
    %714 = vmatprep.subr.mxu0 0.0
    %715 = vmatpush1.msra.mxu0 0.0
    %716 = vmatprep.subr.mxu0 0.0
    %717 = vmatpush1.msra.mxu0 0.0
    %718 = vmatprep.subr.mxu0 0.0
    %719 = vmatpush1.msra.mxu0 0.0
    %720 = vmatprep.mubr.f32.mxu0 0.0
    %721 = vmatmul.mubr.f32.gmra.mrb[0].mxu0 %v654
    %v722 = vpop.f32.mrb[0].mxu0
    %v723 = vadd.f32 %v652, %v722
    %v724 = vpop.f32.mrb[0].mxu0
    %725 = vdwg.mxu0
    %v726 = vlaneseq
    %v727 = vshrl.u32 %v726, 7
    %v728 = vsub.s32 0, %v727
    %v729 = vrot.slane %v723, %v728
    %v730 = vadd.f32 %v628, %v729
    %v731 = vadd.f32 %v633, %v729
    %v732 = vld [vmem:[%s1 + $0x6a] sm:$0x1]
    %s733 = sld [smem:[#allocation2 + $0x1]]
    %v734 = vstv %s733
    %v736 = vsel %vm40, %v732, 0
    %v739 = vsel %vm40, %v730, 0
    %v742 = vsel %vm40, %v731, 0
    %744 = vmatprep.subr.mxu0 0.0
    %745 = vmatpush1.xpose.msra.mxu0 %v739
    %746 = vmatprep.subr.mxu0 0.0
    %747 = vmatpush1.xpose.msra.mxu0 %v742
    %748 = vmatprep.subr.mxu0 0.0
    %749 = vmatpush1.xpose.msra.mxu0 0.0
    %750 = vmatprep.subr.mxu0 0.0
    %751 = vmatpush1.xpose.msra.mxu0 0.0
    %752 = vmatprep.subr.mxu0 0.0
    %753 = vmatpush1.xpose.msra.mxu0 0.0
    %754 = vmatprep.subr.mxu0 0.0
    %755 = vmatpush1.xpose.msra.mxu0 0.0
    %756 = vmatprep.subr.mxu0 0.0
    %757 = vmatpush1.xpose.msra.mxu0 0.0
    %758 = vmatprep.subr.mxu0 0.0
    %759 = vmatpush1.xpose.msra.mxu0 0.0
    %760 = vmatprep.subr.mxu0 0.0
    %761 = vmatpush1.xpose.msra.mxu0 0.0
    %762 = vmatprep.subr.mxu0 0.0
    %763 = vmatpush1.xpose.msra.mxu0 0.0
    %764 = vmatprep.subr.mxu0 0.0
    %765 = vmatpush1.xpose.msra.mxu0 0.0
    %766 = vmatprep.subr.mxu0 0.0
    %767 = vmatpush1.xpose.msra.mxu0 0.0
    %768 = vmatprep.subr.mxu0 0.0
    %769 = vmatpush1.xpose.msra.mxu0 0.0
    %770 = vmatprep.subr.mxu0 0.0
    %771 = vmatpush1.xpose.msra.mxu0 0.0
    %772 = vmatprep.subr.mxu0 0.0
    %773 = vmatpush1.xpose.msra.mxu0 0.0
    %774 = vmatprep.subr.mxu0 0.0
    %775 = vmatpush1.xpose.msra.mxu0 0.0
    %776 = vmatprep.subr.mxu0 0.0
    %777 = vmatpush1.xpose.msra.mxu0 0.0
    %778 = vmatprep.subr.mxu0 0.0
    %779 = vmatpush1.xpose.msra.mxu0 0.0
    %780 = vmatprep.subr.mxu0 0.0
    %781 = vmatpush1.xpose.msra.mxu0 0.0
    %782 = vmatprep.subr.mxu0 0.0
    %783 = vmatpush1.xpose.msra.mxu0 0.0
    %784 = vmatprep.subr.mxu0 0.0
    %785 = vmatpush1.xpose.msra.mxu0 0.0
    %786 = vmatprep.subr.mxu0 0.0
    %787 = vmatpush1.xpose.msra.mxu0 0.0
    %788 = vmatprep.subr.mxu0 0.0
    %789 = vmatpush1.xpose.msra.mxu0 0.0
    %790 = vmatprep.subr.mxu0 0.0
    %791 = vmatpush1.xpose.msra.mxu0 0.0
    %792 = vmatprep.subr.mxu0 0.0
    %793 = vmatpush1.xpose.msra.mxu0 0.0
    %794 = vmatprep.subr.mxu0 0.0
    %795 = vmatpush1.xpose.msra.mxu0 0.0
    %796 = vmatprep.subr.mxu0 0.0
    %797 = vmatpush1.xpose.msra.mxu0 0.0
    %798 = vmatprep.subr.mxu0 0.0
    %799 = vmatpush1.xpose.msra.mxu0 0.0
    %800 = vmatprep.subr.mxu0 0.0
    %801 = vmatpush1.xpose.msra.mxu0 0.0
    %802 = vmatprep.subr.mxu0 0.0
    %803 = vmatpush1.xpose.msra.mxu0 0.0
    %804 = vmatprep.subr.mxu0 0.0
    %805 = vmatpush1.xpose.msra.mxu0 0.0
    %806 = vmatprep.subr.mxu0 0.0
    %807 = vmatpush1.xpose.msra.mxu0 0.0
    %808 = vmatprep.mubr.f32.mxu0 0.0
    %809 = vmatmul.mubr.f32.gmra.mrb[0].mxu0 %v736
    %v810 = vpop.f32.mrb[0].mxu0
    %v811 = vadd.f32 %v734, %v810
    %v812 = vpop.f32.mrb[0].mxu0
    %813 = vdwg.mxu0
    %v814 = vsub.f32 0.0, %v811
    %v815 = vmul.f32 %v814, 1.442695
    %v816 = vpow.pop %v815
    %v817 = vadd.f32 %v816, 1.0
    %v818 = vrcp.pop %v817
    %v819 = vsel %vm40, %v730, 0.0
    %v820 = vsel %vm40, %v731, 0.0
    %v821 = vadd.f32 %v819, %v820
    %v822 = vrot.slane %v821, 4
    %v823 = vadd.f32 %v821, %v822
    %v824 = vrot.slane %v823, 2
    %v825 = vadd.f32 %v823, %v824
    %v826 = vrot.slane %v825, 1
    %v827 = vadd.f32 %v825, %v826
    %v828 = vmul.f32 %v827, 0.0625
    %v829 = vld [vmem:[%s1 + $0x6b] sm:$0x1]
    %v830 = vmul.f32 %v828, %v829
    %vm831 = vcmask 253952
    %v832 = vsel %vm831, %v830, 0.0
    %833 = vadd.xlane.f32.xlu0 %v832
    %v834 = vpop.xlane.xlu0 %833
    %s835 = sld [smem:[#allocation2 + $0x2]]
    %v836 = vstv %s835
    %v837 = vadd.f32 %v834, %v836
    %v838 = vsub.f32 0.0, %v837
    %v839 = vmul.f32 %v838, 1.442695
    %v840 = vpow.pop %v839
    %v841 = vadd.f32 %v840, 1.0
    %v842 = vrcp.pop %v841
    %v843 = vld [vmem:[%s1 + $0x6c] sm:$0x1]
    %v844 = vmul.f32 %v828, %v843
    %v845 = vsel %vm831, %v844, 0.0
    %846 = vadd.xlane.f32.xlu0 %v845
    %v847 = vpop.xlane.xlu0 %846
    %s848 = sld [smem:[#allocation2 + $0x3]]
    %v849 = vstv %s848
    %v850 = vadd.f32 %v847, %v849
    %v851 = vsub.f32 0.0, %v850
    %v852 = vmul.f32 %v851, 1.442695
    %v853 = vpow.pop %v852
    %v854 = vadd.f32 %v853, 1.0
    %v855 = vrcp.pop %v854
    %v856 = vlaneseq
    %v857 = vshrl.u32 %v856, 7
    %v858 = vadd.s32 %v857, 8
    %v859 = vlaneseq
    %v860 = vand.u32 %v859, 127
    %vm861 = vcmp.eq.s32.totalorder %v857, %v860
    %vm862 = vcmp.eq.s32.totalorder %v858, %v860
    %v863 = vsel %vm861, 1, 0
    %v864 = vsel %vm862, 1, 0
    %v865 = vcvt.s32.f32 %v863
    %v866 = vcvt.s32.f32 %v864
    %v868 = vsel %vm224, %v818, 0
    %870 = vmatprep.subr.mxu0 0.0
    %871 = vmatpush1.msra.mxu0 %v865
    %872 = vmatprep.subr.mxu0 0.0
    %873 = vmatpush1.msra.mxu0 %v866
    %874 = vmatprep.subr.mxu0 0.0
    %875 = vmatpush1.msra.mxu0 0.0
    %876 = vmatprep.subr.mxu0 0.0
    %877 = vmatpush1.msra.mxu0 0.0
    %878 = vmatprep.subr.mxu0 0.0
    %879 = vmatpush1.msra.mxu0 0.0
    %880 = vmatprep.subr.mxu0 0.0
    %881 = vmatpush1.msra.mxu0 0.0
    %882 = vmatprep.subr.mxu0 0.0
    %883 = vmatpush1.msra.mxu0 0.0
    %884 = vmatprep.subr.mxu0 0.0
    %885 = vmatpush1.msra.mxu0 0.0
    %886 = vmatprep.subr.mxu0 0.0
    %887 = vmatpush1.msra.mxu0 0.0
    %888 = vmatprep.subr.mxu0 0.0
    %889 = vmatpush1.msra.mxu0 0.0
    %890 = vmatprep.subr.mxu0 0.0
    %891 = vmatpush1.msra.mxu0 0.0
    %892 = vmatprep.subr.mxu0 0.0
    %893 = vmatpush1.msra.mxu0 0.0
    %894 = vmatprep.subr.mxu0 0.0
    %895 = vmatpush1.msra.mxu0 0.0
    %896 = vmatprep.subr.mxu0 0.0
    %897 = vmatpush1.msra.mxu0 0.0
    %898 = vmatprep.subr.mxu0 0.0
    %899 = vmatpush1.msra.mxu0 0.0
    %900 = vmatprep.subr.mxu0 0.0
    %901 = vmatpush1.msra.mxu0 0.0
    %902 = vmatprep.subr.mxu0 0.0
    %903 = vmatpush1.msra.mxu0 0.0
    %904 = vmatprep.subr.mxu0 0.0
    %905 = vmatpush1.msra.mxu0 0.0
    %906 = vmatprep.subr.mxu0 0.0
    %907 = vmatpush1.msra.mxu0 0.0
    %908 = vmatprep.subr.mxu0 0.0
    %909 = vmatpush1.msra.mxu0 0.0
    %910 = vmatprep.subr.mxu0 0.0
    %911 = vmatpush1.msra.mxu0 0.0
    %912 = vmatprep.subr.mxu0 0.0
    %913 = vmatpush1.msra.mxu0 0.0
    %914 = vmatprep.subr.mxu0 0.0
    %915 = vmatpush1.msra.mxu0 0.0
    %916 = vmatprep.subr.mxu0 0.0
    %917 = vmatpush1.msra.mxu0 0.0
    %918 = vmatprep.subr.mxu0 0.0
    %919 = vmatpush1.msra.mxu0 0.0
    %920 = vmatprep.subr.mxu0 0.0
    %921 = vmatpush1.msra.mxu0 0.0
    %922 = vmatprep.subr.mxu0 0.0
    %923 = vmatpush1.msra.mxu0 0.0
    %924 = vmatprep.subr.mxu0 0.0
    %925 = vmatpush1.msra.mxu0 0.0
    %926 = vmatprep.subr.mxu0 0.0
    %927 = vmatpush1.msra.mxu0 0.0
    %928 = vmatprep.subr.mxu0 0.0
    %929 = vmatpush1.msra.mxu0 0.0
    %930 = vmatprep.subr.mxu0 0.0
    %931 = vmatpush1.msra.mxu0 0.0
    %932 = vmatprep.subr.mxu0 0.0
    %933 = vmatpush1.msra.mxu0 0.0
    %934 = vmatprep.mubr.f32.mxu0 0.0
    %935 = vmatmul.mubr.f32.gmra.mrb[0].mxu0 %v868
    %v936 = vpop.f32.mrb[0].mxu0
    %v937 = vadd.f32 0.0, %v936
    %v938 = vpop.f32.mrb[0].mxu0
    %939 = vdwg.mxu0
    %vm940 = vcmp.eq.s32.totalorder %v860, 16
    %v941 = vsel %vm940, %v842, %v937
    %vm942 = vcmp.eq.s32.totalorder %v860, 17
    %v943 = vsel %vm942, %v855, %v941
    %944 = vst [vmem:[#allocation5] sm:$0x1] %v943
    // Predicated region
    $region18: #{tpu_custom_call.1} parent=1 // pred_check
      _
    $region19: #{tpu_custom_call.1} parent=1 // pred_check_branch
      %946 = sbr.rel (0) target = $region21
    $region20: #{tpu_custom_call.1} parent=1 // pred_region
      %s948 = ssub.s32 16, 16
      %949 = vsyncadd [#allocation3], %s948
      %s951 = sshll.u32 [#allocation5], 4
      %s952 = int_to_ptr.vmem [resolvable:$true] %s951
      %954 = dma.vmem_to_hbm [thread:$0]  %s952, 16, %s3, [#allocation3]
    $region21: #{tpu_custom_call.1} parent=1 // pred_fallthru
      _
    // Predicated region
    $region22: #{tpu_custom_call.1} parent=1 // pred_check
      _
    $region23: #{tpu_custom_call.1} parent=1 // pred_check_branch
      %956 = sbr.rel (0) target = $region25
    $region24: #{tpu_custom_call.1} parent=1 // pred_region
      %957 = dma.done [#allocation3], 16
    $region25: #{tpu_custom_call.1} parent=1 // pred_fallthru
      _
    %958 = vsyncpa [#allocation3], 1
    %959 = vsyncpa [#allocation4], 1

</llo_original>
